<compile_context>
chip_gen: v7x
topology: tpu7x:2x2x1
jax: 0.10.0
libtpu: 0.0.40
codegen_flags: <defaults>
</compile_context>

<pallas_src>
import functools

import jax
import jax.numpy as jnp
from jax.experimental import pallas as pl
from jax.experimental.pallas import tpu as pltpu


# ------------------------------ Pallas kernel ------------------------------- #

def _zero_hop_kernel(x_ref, wT_ref, b_ref, o_ref, *, apply_relu, apply_bn, eps):
    # x_ref : (M, K)      rows of V (M = B*N or a row tile), K = F_in
    # wT_ref: (K, N_out)  pre-transposed lin_A weight
    # b_ref : (1, N_out)  lin_A bias
    # o_ref : (M, N_out)
    y = jnp.dot(x_ref[...], wT_ref[...], preferred_element_type=jnp.float32) + b_ref[...]
    if apply_relu:
        y = jnp.maximum(y, 0.0)
    if apply_bn:
        # Training-mode BN over the channel (last) dim: statistics over all rows.
        mean = jnp.mean(y, axis=0, keepdims=True)
        var = jnp.mean((y - mean) * (y - mean), axis=0, keepdims=True)
        y = (y - mean) * jax.lax.rsqrt(var + eps)
    o_ref[...] = y.astype(o_ref.dtype)


# --------------------------------- Wrapper ----------------------------------- #

_ROW_TILE = 256  # rows per grid step on the tiled (no-BN) path


@functools.partial(jax.jit, static_argnames=("is_relu", "is_bn", "eps"))
def zero_hop_filter(V, weight, bias, *, is_relu=False, is_bn=False, eps=1e-5):
    """Fused ZeroHopFilter forward.

    V: (B, N, F_in); weight: (F_out, F_in); bias: (F_out,). Returns (B, N, F_out).
    """
    B, N, K = V.shape
    N_out = weight.shape[0]
    M = B * N

    x = V.astype(jnp.float32).reshape(M, K)           # collapse batch into M rows
    wT = jnp.transpose(weight.astype(jnp.float32))    # (K, N_out), once at trace time
    b2 = bias.astype(jnp.float32).reshape(1, N_out)

    kern = functools.partial(_zero_hop_kernel, apply_relu=is_relu, apply_bn=is_bn, eps=eps)

    if is_bn or M <= _ROW_TILE:
        # Single grid-less invocation: whole problem lives in VMEM.  Required
        # when BN is on (global row statistics), optimal when everything fits.
        out = pl.pallas_call(
            kern,
            out_shape=jax.ShapeDtypeStruct((M, N_out), jnp.float32),
        )(x, wT, b2)
        return out.reshape(B, N, N_out)

    # Row-tiled path (no BN): rows are independent, so tile M and mark the
    # grid axis "parallel" for megacore sharding.  Weight / bias blocks stay
    # resident (same block index every step).
    TM = _ROW_TILE
    M_pad = pl.cdiv(M, TM) * TM
    if M_pad != M:
        x = jnp.pad(x, ((0, M_pad - M), (0, 0)))      # padded rows are sliced off below

    out = pl.pallas_call(
        kern,
        out_shape=jax.ShapeDtypeStruct((M_pad, N_out), jnp.float32),
        grid_spec=pltpu.PrefetchScalarGridSpec(
            num_scalar_prefetch=0,
            grid=(M_pad // TM,),
            in_specs=[
                pl.BlockSpec((TM, K), lambda i: (i, 0)),
                pl.BlockSpec((K, N_out), lambda i: (0, 0)),
                pl.BlockSpec((1, N_out), lambda i: (0, 0)),
            ],
            out_specs=pl.BlockSpec((TM, N_out), lambda i: (i, 0)),
        ),
        compiler_params=pltpu.CompilerParams(dimension_semantics=("parallel",)),
    )(x, wT, b2)
    return out[:M].reshape(B, N, N_out)


# ----------------------------- Pure-JAX reference --------------------------- #

def reference(V, weight, bias, *, is_relu=False, is_bn=False, eps=1e-5):
    v = V.astype(jnp.float32) @ weight.astype(jnp.float32).T + bias.astype(jnp.float32)
    if is_relu:
        v = jnp.maximum(v, 0.0)
    if is_bn:
        mean = v.mean(axis=(0, 1), keepdims=True)
        var = ((v - mean) ** 2).mean(axis=(0, 1), keepdims=True)
        v = (v - mean) / jnp.sqrt(var + eps)
    return v


# ---------------------------------- Main ------------------------------------ #

if __name__ == "__main__":
    # input_features_V = output_features_V = 16 (keeps the torch BN channel count
    # valid), batch = 2, nodes = 8.
    B, N, F_in, F_out = 2, 8, 16, 16

    key = jax.random.PRNGKey(0)
    kV, kW, kV2 = jax.random.split(key, 3)

    V = jax.random.normal(kV, (B, N, F_in), jnp.float32)

    # Parameter init mirroring the torch module:
    #   weight ~ N(0, 1/sqrt(input_features_V * 2)), bias = 0.1
    std = 1.0 / ((F_in * 2.0) ** 0.5)
    weight = std * jax.random.normal(kW, (F_out, F_in), jnp.float32)
    bias = jnp.full((F_out,), 0.1, jnp.float32)

    # Default configuration (is_relu=False, is_bn=False) ...
    out_plain = zero_hop_filter(V, weight, bias, is_relu=False, is_bn=False)
    # ... and the full path (ReLU + BatchNorm) exercising the fused epilogue.
    out_full = zero_hop_filter(V, weight, bias, is_relu=True, is_bn=True)
    jax.block_until_ready((out_plain, out_full))

    ref_plain = reference(V, weight, bias, is_relu=False, is_bn=False)
    ref_full = reference(V, weight, bias, is_relu=True, is_bn=True)

    assert out_plain.shape == (B, N, F_out) and out_full.shape == (B, N, F_out)
    assert jnp.allclose(out_plain, ref_plain, atol=1e-4, rtol=1e-4)
    assert jnp.allclose(out_full, ref_full, atol=1e-4, rtol=1e-4)

    # Also exercise the row-tiled (no-BN) path with a larger node count.
    N_big = 320                                   # M = 640 -> 3 row tiles of 256
    V_big = jax.random.normal(kV2, (B, N_big, F_in), jnp.float32)
    out_big = zero_hop_filter(V_big, weight, bias, is_relu=True, is_bn=False)
    jax.block_until_ready(out_big)
    ref_big = reference(V_big, weight, bias, is_relu=True, is_bn=False)
    assert out_big.shape == (B, N_big, F_out)
    assert jnp.allclose(out_big, ref_big, atol=1e-4, rtol=1e-4)

    print("KERNEL_OK")
</pallas_src>

<mosaic_0001>
module attributes {stable_mosaic.version = 11 : i64} {
  func.func @_zero_hop_kernel(%arg0: memref<16x16xf32, #tpu.memory_space<vmem>>, %arg1: memref<16x16xf32, #tpu.memory_space<vmem>>, %arg2: memref<1x16xf32, #tpu.memory_space<vmem>>, %arg3: memref<16x16xf32, #tpu.memory_space<vmem>>) attributes {dimension_semantics = [], scalar_prefetch = 0 : i64, scratch_operands = 0 : i64, tpu.core_type = #tpu.core_type<tc>} {
    %c0 = arith.constant 0 : index
    %c0_0 = arith.constant 0 : index
    %0 = vector.load %arg0[%c0, %c0_0] : memref<16x16xf32, #tpu.memory_space<vmem>>, vector<16x16xf32>
    %c0_1 = arith.constant 0 : index
    %c0_2 = arith.constant 0 : index
    %1 = vector.load %arg1[%c0_1, %c0_2] : memref<16x16xf32, #tpu.memory_space<vmem>>, vector<16x16xf32>
    %cst = arith.constant dense<0.000000e+00> : vector<16x16xf32>
    %2 = tpu.matmul %0, %1, %cst {dimension_numbers = #tpu.dot_dimension_numbers<[1], [0], [0], [1], [0, 0, 1, 1], [], []>} : vector<16x16xf32>, vector<16x16xf32>, vector<16x16xf32> -> vector<16x16xf32>
    %c0_3 = arith.constant 0 : index
    %c0_4 = arith.constant 0 : index
    %3 = vector.load %arg2[%c0_3, %c0_4] : memref<1x16xf32, #tpu.memory_space<vmem>>, vector<1x16xf32>
    %4 = vector.broadcast %3 : vector<1x16xf32> to vector<16x16xf32>
    %5 = arith.addf %2, %4 : vector<16x16xf32>
    %c0_5 = arith.constant 0 : index
    %c0_6 = arith.constant 0 : index
    %6 = vector.load %arg3[%c0_5, %c0_6] : memref<16x16xf32, #tpu.memory_space<vmem>>, vector<16x16xf32>
    tpu.vector_store %arg3[%c0_5, %c0_6], %5 {strides = array<i32>} : memref<16x16xf32, #tpu.memory_space<vmem>>, vector<16x16xf32>,
    return
  }
}

</mosaic_0001>

<llo_original>
// kernel: zero_hop_filter.1
$region0: #{zero_hop_filter.1}
  #allocation0 [shape = 'u32[]', space=smem, size = 0x4, offset = 0x4, fixed_abs, tag = 'smem constant byte address 0x4 - core index']
  #allocation1 [shape = 'u32[144,128]{1,0:T(1,128)}', space=vmem, size = 0x12000, scoped, tag = 'internal scratch']
  %s0 = inlined_call_operand.vmem [shape: f32[16,16], index: 0, kind: input, shape index: {}]
  %s1 = inlined_call_operand.vmem [shape: f32[16,16], index: 1, kind: input, shape index: {}]
  %s2 = inlined_call_operand.vmem [shape: f32[1,16], index: 2, kind: input, shape index: {}]
  %s3 = inlined_call_operand.hbm [shape: f32[16,16], index: 3, kind: output, shape index: {}]
  %s4 = sld [smem:[#allocation0]]
  $region22: #{zero_hop_filter.1} parent=0
    _
  %s6 = ssub.s32 1, %s4
  %s7 = scalar_select 0, %s6, %s4
  $region1: #{zero_hop_filter.1} parent=0
    #allocation2 [shape = 'u8[8192]{0}', space=vmem, size = 0x2000, scoped, tag = 'output window, operand 0, single buffered']
    #allocation3 [shape = 's32[1]{0}', space=sflag, size = 0x4, scoped, tag = 'scoped memory for zero_hop_filter.1']
    %8 = vsyncpa [#allocation3], 0
    // Predicated region
    $region2: #{zero_hop_filter.1} parent=1 // pred_check
      _
    $region3: #{zero_hop_filter.1} parent=1 // pred_check_branch
      %10 = sbr.rel (0) target = $region5
    $region4: #{zero_hop_filter.1} parent=1 // pred_region
      _
    $region5: #{zero_hop_filter.1} parent=1 // pred_fallthru
      _
    // Predicated region
    $region6: #{zero_hop_filter.1} parent=1 // pred_check
      _
    $region7: #{zero_hop_filter.1} parent=1 // pred_check_branch
      %12 = sbr.rel (0) target = $region9
    $region8: #{zero_hop_filter.1} parent=1 // pred_region
      _
    $region9: #{zero_hop_filter.1} parent=1 // pred_fallthru
      _
    // Predicated region
    $region10: #{zero_hop_filter.1} parent=1 // pred_check
      _
    $region11: #{zero_hop_filter.1} parent=1 // pred_check_branch
      %14 = sbr.rel (0) target = $region13
    $region12: #{zero_hop_filter.1} parent=1 // pred_region
      _
    $region13: #{zero_hop_filter.1} parent=1 // pred_fallthru
      _
    %v15 = vld [vmem:[%s0] sm:$0xff]
    %v16 = vld [vmem:[%s0 + $0x8] sm:$0xff]
    %v17 = vld [vmem:[%s1] sm:$0xff]
    %v18 = vld [vmem:[%s1 + $0x8] sm:$0xff]
    %v19 = vld [vmem:[%s2] sm:$0x1]
    %v21 = vlaneseq
    %v22 = vshrl.u32 %v21, 7
    %v23 = vsub.s32 0, %v22
    %v24 = vrot.slane %v19, %v23
    %vm26 = vcmask 130048
    %v28 = vsel %vm26, %v15, 0
    %v31 = vsel %vm26, %v16, 0
    %33 = vmatprep.subr.mxu0 0.0
    %34 = vmatpush1.msra.mxu0 %v17
    %35 = vmatprep.subr.mxu0 0.0
    %36 = vmatpush1.msra.mxu0 %v18
    %37 = vmatprep.subr.mxu0 0.0
    %38 = vmatpush1.msra.mxu0 0.0
    %39 = vmatprep.subr.mxu0 0.0
    %40 = vmatpush1.msra.mxu0 0.0
    %41 = vmatprep.subr.mxu0 0.0
    %42 = vmatpush1.msra.mxu0 0.0
    %43 = vmatprep.subr.mxu0 0.0
    %44 = vmatpush1.msra.mxu0 0.0
    %45 = vmatprep.subr.mxu0 0.0
    %46 = vmatpush1.msra.mxu0 0.0
    %47 = vmatprep.subr.mxu0 0.0
    %48 = vmatpush1.msra.mxu0 0.0
    %49 = vmatprep.subr.mxu0 0.0
    %50 = vmatpush1.msra.mxu0 0.0
    %51 = vmatprep.subr.mxu0 0.0
    %52 = vmatpush1.msra.mxu0 0.0
    %53 = vmatprep.subr.mxu0 0.0
    %54 = vmatpush1.msra.mxu0 0.0
    %55 = vmatprep.subr.mxu0 0.0
    %56 = vmatpush1.msra.mxu0 0.0
    %57 = vmatprep.subr.mxu0 0.0
    %58 = vmatpush1.msra.mxu0 0.0
    %59 = vmatprep.subr.mxu0 0.0
    %60 = vmatpush1.msra.mxu0 0.0
    %61 = vmatprep.subr.mxu0 0.0
    %62 = vmatpush1.msra.mxu0 0.0
    %63 = vmatprep.subr.mxu0 0.0
    %64 = vmatpush1.msra.mxu0 0.0
    %65 = vmatprep.subr.mxu0 0.0
    %66 = vmatpush1.msra.mxu0 0.0
    %67 = vmatprep.subr.mxu0 0.0
    %68 = vmatpush1.msra.mxu0 0.0
    %69 = vmatprep.subr.mxu0 0.0
    %70 = vmatpush1.msra.mxu0 0.0
    %71 = vmatprep.subr.mxu0 0.0
    %72 = vmatpush1.msra.mxu0 0.0
    %73 = vmatprep.subr.mxu0 0.0
    %74 = vmatpush1.msra.mxu0 0.0
    %75 = vmatprep.subr.mxu0 0.0
    %76 = vmatpush1.msra.mxu0 0.0
    %77 = vmatprep.subr.mxu0 0.0
    %78 = vmatpush1.msra.mxu0 0.0
    %79 = vmatprep.subr.mxu0 0.0
    %80 = vmatpush1.msra.mxu0 0.0
    %81 = vmatprep.subr.mxu0 0.0
    %82 = vmatpush1.msra.mxu0 0.0
    %83 = vmatprep.subr.mxu0 0.0
    %84 = vmatpush1.msra.mxu0 0.0
    %85 = vmatprep.subr.mxu0 0.0
    %86 = vmatpush1.msra.mxu0 0.0
    %87 = vmatprep.subr.mxu0 0.0
    %88 = vmatpush1.msra.mxu0 0.0
    %89 = vmatprep.subr.mxu0 0.0
    %90 = vmatpush1.msra.mxu0 0.0
    %91 = vmatprep.subr.mxu0 0.0
    %92 = vmatpush1.msra.mxu0 0.0
    %93 = vmatprep.subr.mxu0 0.0
    %94 = vmatpush1.msra.mxu0 0.0
    %95 = vmatprep.subr.mxu0 0.0
    %96 = vmatpush1.msra.mxu0 0.0
    %97 = vmatprep.mubr.f32.mxu0 0.0
    %98 = vmatmul.mubr.f32.gmra.mrb[0].mxu0 %v28
    %v99 = vpop.f32.mrb[0].mxu0
    %v100 = vadd.f32 %v24, %v99
    %v101 = vpop.f32.mrb[0].mxu0
    %102 = vmatprep.mubr.f32.mxu0 0.0
    %103 = vmatmul.mubr.f32.gmra.mrb[0].mxu0 %v31
    %v104 = vpop.f32.mrb[0].mxu0
    %v105 = vadd.f32 %v24, %v104
    %v106 = vpop.f32.mrb[0].mxu0
    %107 = vdwg.mxu0
    %108 = vst.msk [vmem:[#allocation2] sm:$0xff] %vm26, %v100
    %109 = vst.msk [vmem:[#allocation2 + $0x8] sm:$0xff] %vm26, %v105
    // Predicated region
    $region14: #{zero_hop_filter.1} parent=1 // pred_check
      _
    $region15: #{zero_hop_filter.1} parent=1 // pred_check_branch
      %111 = sbr.rel (0) target = $region17
    $region16: #{zero_hop_filter.1} parent=1 // pred_region
      %s113 = ssub.s32 256, 256
      %114 = vsyncadd [#allocation3], %s113
      %s115 = sshll.u32 [#allocation2], 4
      %s116 = int_to_ptr.vmem [resolvable:$true] %s115
      %121 = dma.vmem_to_hbm [thread:$0]  %s116, 256, %s3, [#allocation3], 128, 128, 8
    $region17: #{zero_hop_filter.1} parent=1 // pred_fallthru
      _
    // Predicated region
    $region18: #{zero_hop_filter.1} parent=1 // pred_check
      _
    $region19: #{zero_hop_filter.1} parent=1 // pred_check_branch
      %123 = sbr.rel (0) target = $region21
    $region20: #{zero_hop_filter.1} parent=1 // pred_region
      %124 = dma.done [#allocation3], 256
    $region21: #{zero_hop_filter.1} parent=1 // pred_fallthru
      _
    %125 = vsyncpa [#allocation3], 1

</llo_original>
